<compile_context>
chip_gen: v7x
topology: tpu7x:2x2x1
jax: 0.10.0
libtpu: 0.0.40
codegen_flags: <defaults>
</compile_context>

<pallas_src>
import functools
import math

import jax
import jax.numpy as jnp
from jax.experimental import pallas as pl
from jax.experimental.pallas import tpu as pltpu


def _fm_kernel(x_ref, o_ref, *, num_fields, embed_dim, group):
    """x_ref: (rows, group*num_fields*embed_dim); o_ref: (rows, group*embed_dim)."""
    F, D, g = num_fields, embed_dim, group
    x = x_ref[...].astype(jnp.float32)      # accumulate in f32 (bf16/fp8 safe)

    outs = []
    for j in range(g):                      # g is small (1..16): static unroll
        base = j * F * D
        s = x[:, base:base + D]             # running sum_f x_f
        ss = s * s                          # running sum_f x_f^2
        for f in range(1, F):
            xf = x[:, base + f * D: base + (f + 1) * D]
            s = s + xf
            ss = ss + xf * xf
        outs.append(0.5 * (s * s - ss))

    res = outs[0] if g == 1 else jnp.concatenate(outs, axis=1)
    o_ref[...] = res.astype(o_ref.dtype)


def _choose_row_tile(rows_total, row_bytes, target_bytes, max_rows):
    """Largest multiple-of-8 row tile that divides rows_total and fits the budget."""
    r = max(8, min(rows_total, max_rows, target_bytes // max(row_bytes, 1)))
    r = max(8, (r // 8) * 8)
    if r >= rows_total:
        r = rows_total
        # Prefer >= 2 grid steps so the parallel axis can use both v7x TCs.
        if rows_total >= 16:
            half = ((rows_total // 2) // 8) * 8
            if half >= 8 and rows_total % half == 0:
                r = half
    else:
        # rows_total is a multiple of 8, so this terminates at r >= 8.
        while rows_total % r != 0:
            r -= 8
    return r


def factorization_machine(x, *, target_tile_bytes=6 << 20, max_tile_rows=4096):
    """x: (B, F, D) -> (B, D), matching the PyTorch FactorizationMachine."""
    B, F, D = x.shape
    itemsize = jnp.dtype(x.dtype).itemsize

    # Lane group: smallest g with (g * D) % 128 == 0, capped to keep padding small.
    g = 128 // math.gcd(D, 128)
    if D % 128 == 0 or g > 16:
        g = 1

    row_align = 8 * g                        # sublane (8) x lane-group alignment
    Bp = ((B + row_align - 1) // row_align) * row_align
    if Bp != B:                              # zero rows -> zero outputs, sliced off
        x = jnp.pad(x, ((0, Bp - B), (0, 0), (0, 0)))

    rows_total = Bp // g
    c_in = g * F * D
    c_out = g * D

    # Free reshape (contiguous): x_flat[i, j*F*D + f*D + d] == x[i*g + j, f, d]
    x_flat = x.reshape(rows_total, c_in)

    r = _choose_row_tile(rows_total, c_in * itemsize, target_tile_bytes, max_tile_rows)
    grid = (rows_total // r,)

    in_block_bytes = 2 * r * c_in * itemsize       # double-buffered input
    out_block_bytes = 2 * r * c_out * itemsize     # double-buffered output
    vmem_limit = int(min(48 << 20,
                         max(in_block_bytes + out_block_bytes + (4 << 20), 16 << 20)))

    kernel = functools.partial(_fm_kernel, num_fields=F, embed_dim=D, group=g)

    out_flat = pl.pallas_call(
        kernel,
        out_shape=jax.ShapeDtypeStruct((rows_total, c_out), x.dtype),
        grid=grid,
        in_specs=[pl.BlockSpec((r, c_in), lambda i: (i, 0))],
        out_specs=pl.BlockSpec((r, c_out), lambda i: (i, 0)),
        compiler_params=pltpu.CompilerParams(
            dimension_semantics=("parallel",),
            vmem_limit_bytes=vmem_limit,
        ),
        cost_estimate=pl.CostEstimate(
            flops=3 * Bp * F * D,
            transcendentals=0,
            bytes_accessed=Bp * F * D * itemsize + Bp * D * itemsize,
        ),
    )(x_flat)

    # Free reshape back to (Bp, D); drop batch padding.
    return out_flat.reshape(Bp, D)[:B]


def fm_reference(x):
    square_of_sum = jnp.sum(x, axis=1) ** 2
    sum_of_square = jnp.sum(x ** 2, axis=1)
    return 0.5 * (square_of_sum - sum_of_square)


if __name__ == "__main__":
    key = jax.random.PRNGKey(0)
    # Small shapes consistent with the module: (batch, num_fields, embed_dim)
    B, F, D = 8, 4, 32
    x = jax.random.normal(key, (B, F, D), dtype=jnp.float32)

    out = factorization_machine(x)
    out = jax.block_until_ready(out)

    ref = fm_reference(x)
    assert out.shape == (B, D)
    assert out.dtype == x.dtype
    assert jnp.allclose(out, ref, atol=1e-5, rtol=1e-5), "mismatch vs reference"

    print("KERNEL_OK")
</pallas_src>

<mosaic_0001>
module attributes {stable_mosaic.version = 11 : i64} {
  func.func @_fm_kernel(%arg0: i32, %arg1: memref<8x512xf32, #tpu.memory_space<vmem>>, %arg2: memref<8x128xf32, #tpu.memory_space<vmem>>) attributes {dimension_semantics = [#tpu.dimension_semantics<parallel>], iteration_bounds = array<i64: 1>, scalar_prefetch = 0 : i64, scratch_operands = 0 : i64, tpu.core_type = #tpu.core_type<tc>, window_params = [{transform_indices = @transform_0, window_bounds = array<i64: 8, 512>}, {transform_indices = @transform_1, window_bounds = array<i64: 8, 128>}]} {
    %c0 = arith.constant 0 : index
    %c0_0 = arith.constant 0 : index
    %0 = vector.load %arg1[%c0, %c0_0] : memref<8x512xf32, #tpu.memory_space<vmem>>, vector<8x512xf32>
    %1 = vector.extract_strided_slice %0 {offsets = [0, 0], sizes = [8, 32], strides = [1, 1]} : vector<8x512xf32> to vector<8x32xf32>
    %2 = arith.mulf %1, %1 : vector<8x32xf32>
    %3 = vector.extract_strided_slice %0 {offsets = [0, 32], sizes = [8, 32], strides = [1, 1]} : vector<8x512xf32> to vector<8x32xf32>
    %4 = arith.addf %1, %3 : vector<8x32xf32>
    %5 = arith.mulf %3, %3 : vector<8x32xf32>
    %6 = arith.addf %2, %5 : vector<8x32xf32>
    %7 = vector.extract_strided_slice %0 {offsets = [0, 64], sizes = [8, 32], strides = [1, 1]} : vector<8x512xf32> to vector<8x32xf32>
    %8 = arith.addf %4, %7 : vector<8x32xf32>
    %9 = arith.mulf %7, %7 : vector<8x32xf32>
    %10 = arith.addf %6, %9 : vector<8x32xf32>
    %11 = vector.extract_strided_slice %0 {offsets = [0, 96], sizes = [8, 32], strides = [1, 1]} : vector<8x512xf32> to vector<8x32xf32>
    %12 = arith.addf %8, %11 : vector<8x32xf32>
    %13 = arith.mulf %11, %11 : vector<8x32xf32>
    %14 = arith.addf %10, %13 : vector<8x32xf32>
    %15 = arith.mulf %12, %12 : vector<8x32xf32>
    %16 = arith.subf %15, %14 : vector<8x32xf32>
    %cst = arith.constant 5.000000e-01 : f32
    %17 = vector.broadcast %cst : f32 to vector<8x32xf32>
    %18 = arith.mulf %17, %16 : vector<8x32xf32>
    %19 = vector.extract_strided_slice %0 {offsets = [0, 128], sizes = [8, 32], strides = [1, 1]} : vector<8x512xf32> to vector<8x32xf32>
    %20 = arith.mulf %19, %19 : vector<8x32xf32>
    %21 = vector.extract_strided_slice %0 {offsets = [0, 160], sizes = [8, 32], strides = [1, 1]} : vector<8x512xf32> to vector<8x32xf32>
    %22 = arith.addf %19, %21 : vector<8x32xf32>
    %23 = arith.mulf %21, %21 : vector<8x32xf32>
    %24 = arith.addf %20, %23 : vector<8x32xf32>
    %25 = vector.extract_strided_slice %0 {offsets = [0, 192], sizes = [8, 32], strides = [1, 1]} : vector<8x512xf32> to vector<8x32xf32>
    %26 = arith.addf %22, %25 : vector<8x32xf32>
    %27 = arith.mulf %25, %25 : vector<8x32xf32>
    %28 = arith.addf %24, %27 : vector<8x32xf32>
    %29 = vector.extract_strided_slice %0 {offsets = [0, 224], sizes = [8, 32], strides = [1, 1]} : vector<8x512xf32> to vector<8x32xf32>
    %30 = arith.addf %26, %29 : vector<8x32xf32>
    %31 = arith.mulf %29, %29 : vector<8x32xf32>
    %32 = arith.addf %28, %31 : vector<8x32xf32>
    %33 = arith.mulf %30, %30 : vector<8x32xf32>
    %34 = arith.subf %33, %32 : vector<8x32xf32>
    %cst_1 = arith.constant 5.000000e-01 : f32
    %35 = vector.broadcast %cst_1 : f32 to vector<8x32xf32>
    %36 = arith.mulf %35, %34 : vector<8x32xf32>
    %37 = vector.extract_strided_slice %0 {offsets = [0, 256], sizes = [8, 32], strides = [1, 1]} : vector<8x512xf32> to vector<8x32xf32>
    %38 = arith.mulf %37, %37 : vector<8x32xf32>
    %39 = vector.extract_strided_slice %0 {offsets = [0, 288], sizes = [8, 32], strides = [1, 1]} : vector<8x512xf32> to vector<8x32xf32>
    %40 = arith.addf %37, %39 : vector<8x32xf32>
    %41 = arith.mulf %39, %39 : vector<8x32xf32>
    %42 = arith.addf %38, %41 : vector<8x32xf32>
    %43 = vector.extract_strided_slice %0 {offsets = [0, 320], sizes = [8, 32], strides = [1, 1]} : vector<8x512xf32> to vector<8x32xf32>
    %44 = arith.addf %40, %43 : vector<8x32xf32>
    %45 = arith.mulf %43, %43 : vector<8x32xf32>
    %46 = arith.addf %42, %45 : vector<8x32xf32>
    %47 = vector.extract_strided_slice %0 {offsets = [0, 352], sizes = [8, 32], strides = [1, 1]} : vector<8x512xf32> to vector<8x32xf32>
    %48 = arith.addf %44, %47 : vector<8x32xf32>
    %49 = arith.mulf %47, %47 : vector<8x32xf32>
    %50 = arith.addf %46, %49 : vector<8x32xf32>
    %51 = arith.mulf %48, %48 : vector<8x32xf32>
    %52 = arith.subf %51, %50 : vector<8x32xf32>
    %cst_2 = arith.constant 5.000000e-01 : f32
    %53 = vector.broadcast %cst_2 : f32 to vector<8x32xf32>
    %54 = arith.mulf %53, %52 : vector<8x32xf32>
    %55 = vector.extract_strided_slice %0 {offsets = [0, 384], sizes = [8, 32], strides = [1, 1]} : vector<8x512xf32> to vector<8x32xf32>
    %56 = arith.mulf %55, %55 : vector<8x32xf32>
    %57 = vector.extract_strided_slice %0 {offsets = [0, 416], sizes = [8, 32], strides = [1, 1]} : vector<8x512xf32> to vector<8x32xf32>
    %58 = arith.addf %55, %57 : vector<8x32xf32>
    %59 = arith.mulf %57, %57 : vector<8x32xf32>
    %60 = arith.addf %56, %59 : vector<8x32xf32>
    %61 = vector.extract_strided_slice %0 {offsets = [0, 448], sizes = [8, 32], strides = [1, 1]} : vector<8x512xf32> to vector<8x32xf32>
    %62 = arith.addf %58, %61 : vector<8x32xf32>
    %63 = arith.mulf %61, %61 : vector<8x32xf32>
    %64 = arith.addf %60, %63 : vector<8x32xf32>
    %65 = vector.extract_strided_slice %0 {offsets = [0, 480], sizes = [8, 32], strides = [1, 1]} : vector<8x512xf32> to vector<8x32xf32>
    %66 = arith.addf %62, %65 : vector<8x32xf32>
    %67 = arith.mulf %65, %65 : vector<8x32xf32>
    %68 = arith.addf %64, %67 : vector<8x32xf32>
    %69 = arith.mulf %66, %66 : vector<8x32xf32>
    %70 = arith.subf %69, %68 : vector<8x32xf32>
    %cst_3 = arith.constant 5.000000e-01 : f32
    %71 = vector.broadcast %cst_3 : f32 to vector<8x32xf32>
    %72 = arith.mulf %71, %70 : vector<8x32xf32>
    %73 = tpu.concatenate %18, %36, %54, %72 in 1 : vector<8x32xf32>, vector<8x32xf32>, vector<8x32xf32>, vector<8x32xf32> -> vector<8x128xf32>
    %c0_4 = arith.constant 0 : index
    %c0_5 = arith.constant 0 : index
    %74 = vector.load %arg2[%c0_4, %c0_5] : memref<8x128xf32, #tpu.memory_space<vmem>>, vector<8x128xf32>
    tpu.vector_store %arg2[%c0_4, %c0_5], %73 {strides = array<i32>} : memref<8x128xf32, #tpu.memory_space<vmem>>, vector<8x128xf32>,
    return
  }
  func.func @transform_0(%arg0: i32) -> (i32, i32) {
    %c0_i32 = arith.constant 0 : i32
    %c0_i32_0 = arith.constant 0 : i32
    return %arg0, %c0_i32 : i32, i32
  }
  func.func @transform_1(%arg0: i32) -> (i32, i32) {
    %c0_i32 = arith.constant 0 : i32
    %c0_i32_0 = arith.constant 0 : i32
    return %arg0, %c0_i32 : i32, i32
  }
}

</mosaic_0001>

<llo_original>
// kernel: tpu_custom_call.1
$region0: #{tpu_custom_call.1}
  #allocation0 [shape = 'u32[]', space=smem, size = 0x4, offset = 0x4, fixed_abs, tag = 'smem constant byte address 0x4 - core index']
  #allocation1 [shape = 'u32[144,128]{1,0:T(1,128)}', space=vmem, size = 0x12000, scoped, tag = 'internal scratch']
  %s0 = inlined_call_operand.hbm [shape: f32[8,512], index: 0, kind: input, shape index: {}]
  %s1 = inlined_call_operand.hbm [shape: f32[8,128], index: 1, kind: output, shape index: {}]
  %s2 = sld [smem:[#allocation0]]
  $region18: #{tpu_custom_call.1} parent=0
    _
  %s4 = ssub.s32 1, %s2
  %s5 = scalar_select 0, %s4, %s2
  $region1: #{tpu_custom_call.1} parent=0
    #allocation2 [shape = 'u8[16384]{0}', space=vmem, size = 0x4000, scoped, tag = 'input window, operand 0, single buffered']
    #allocation3 [shape = 's32[1]{0}', space=sflag, size = 0x4, scoped, tag = 'scoped memory for tpu_custom_call.1']
    #allocation4 [shape = 's32[1]{0}', space=sflag, size = 0x4, scoped, tag = 'scoped memory for tpu_custom_call.1']
    #allocation5 [shape = 'u8[4096]{0}', space=vmem, size = 0x1000, scoped, tag = 'output window, operand 0, single buffered']
    %6 = vsyncpa [#allocation3], 0
    %7 = vsyncpa [#allocation4], 0
    // Predicated region
    $region2: #{tpu_custom_call.1} parent=1 // pred_check
      _
    $region3: #{tpu_custom_call.1} parent=1 // pred_check_branch
      %9 = sbr.rel (0) target = $region5
    $region4: #{tpu_custom_call.1} parent=1 // pred_region
      %s11 = ssub.s32 512, 512
      %12 = vsyncadd [#allocation3], %s11
      %s14 = sshll.u32 [#allocation2], 4
      %s15 = int_to_ptr.vmem [resolvable:$true] %s14
      %17 = dma.hbm_to_vmem [thread:$0]  %s0, 512, %s15, [#allocation3]
    $region5: #{tpu_custom_call.1} parent=1 // pred_fallthru
      _
    // Predicated region
    $region6: #{tpu_custom_call.1} parent=1 // pred_check
      _
    $region7: #{tpu_custom_call.1} parent=1 // pred_check_branch
      %19 = sbr.rel (0) target = $region9
    $region8: #{tpu_custom_call.1} parent=1 // pred_region
      %20 = dma.done [#allocation3], 512
    $region9: #{tpu_custom_call.1} parent=1 // pred_fallthru
      _
    %v21 = vld [vmem:[#allocation2] sm:$0xff]
    %v22 = vld [vmem:[#allocation2 + $0x8] sm:$0xff]
    %v23 = vld [vmem:[#allocation2 + $0x10] sm:$0xff]
    %v24 = vld [vmem:[#allocation2 + $0x18] sm:$0xff]
    %v25 = vmul.f32 %v21, %v21
    %27 = vrot.lane.b32.xlu0 %v21, 96
    %v28 = vpop.permute.xlu0 %27
    %v30 = vadd.f32 %v21, %v28
    %32 = vrot.lane.b32.xlu0 %v25, 96
    %v33 = vpop.permute.xlu0 %32
    %v35 = vadd.f32 %v25, %v33
    %36 = vrot.lane.b32.xlu0 %v21, 64
    %v37 = vpop.permute.xlu0 %36
    %v39 = vadd.f32 %v30, %v37
    %40 = vrot.lane.b32.xlu0 %v25, 64
    %v41 = vpop.permute.xlu0 %40
    %v43 = vadd.f32 %v35, %v41
    %44 = vrot.lane.b32.xlu0 %v21, 32
    %v45 = vpop.permute.xlu0 %44
    %v47 = vadd.f32 %v39, %v45
    %48 = vrot.lane.b32.xlu0 %v25, 32
    %v49 = vpop.permute.xlu0 %48
    %v51 = vadd.f32 %v43, %v49
    %v52 = vmul.f32 %v47, %v47
    %v53 = vsub.f32 %v52, %v51
    %v54 = vmul.f32 %v53, 0.5
    %v55 = vmul.f32 %v22, %v22
    %57 = vrot.lane.b32.xlu0 %v22, 96
    %v58 = vpop.permute.xlu0 %57
    %v60 = vadd.f32 %v22, %v58
    %62 = vrot.lane.b32.xlu0 %v55, 96
    %v63 = vpop.permute.xlu0 %62
    %v65 = vadd.f32 %v55, %v63
    %66 = vrot.lane.b32.xlu0 %v22, 64
    %v67 = vpop.permute.xlu0 %66
    %v69 = vadd.f32 %v60, %v67
    %70 = vrot.lane.b32.xlu0 %v55, 64
    %v71 = vpop.permute.xlu0 %70
    %v73 = vadd.f32 %v65, %v71
    %74 = vrot.lane.b32.xlu0 %v22, 32
    %v75 = vpop.permute.xlu0 %74
    %v77 = vadd.f32 %v69, %v75
    %78 = vrot.lane.b32.xlu0 %v55, 32
    %v79 = vpop.permute.xlu0 %78
    %v81 = vadd.f32 %v73, %v79
    %v82 = vmul.f32 %v77, %v77
    %v83 = vsub.f32 %v82, %v81
    %v84 = vmul.f32 %v83, 0.5
    %v85 = vmul.f32 %v23, %v23
    %87 = vrot.lane.b32.xlu0 %v23, 96
    %v88 = vpop.permute.xlu0 %87
    %v90 = vadd.f32 %v23, %v88
    %92 = vrot.lane.b32.xlu0 %v85, 96
    %v93 = vpop.permute.xlu0 %92
    %v95 = vadd.f32 %v85, %v93
    %96 = vrot.lane.b32.xlu0 %v23, 64
    %v97 = vpop.permute.xlu0 %96
    %v99 = vadd.f32 %v90, %v97
    %100 = vrot.lane.b32.xlu0 %v85, 64
    %v101 = vpop.permute.xlu0 %100
    %v103 = vadd.f32 %v95, %v101
    %104 = vrot.lane.b32.xlu0 %v23, 32
    %v105 = vpop.permute.xlu0 %104
    %v107 = vadd.f32 %v99, %v105
    %108 = vrot.lane.b32.xlu0 %v85, 32
    %v109 = vpop.permute.xlu0 %108
    %v111 = vadd.f32 %v103, %v109
    %v112 = vmul.f32 %v107, %v107
    %v113 = vsub.f32 %v112, %v111
    %v114 = vmul.f32 %v113, 0.5
    %v115 = vmul.f32 %v24, %v24
    %117 = vrot.lane.b32.xlu0 %v24, 96
    %v118 = vpop.permute.xlu0 %117
    %v120 = vadd.f32 %v24, %v118
    %122 = vrot.lane.b32.xlu0 %v115, 96
    %v123 = vpop.permute.xlu0 %122
    %v125 = vadd.f32 %v115, %v123
    %126 = vrot.lane.b32.xlu0 %v24, 64
    %v127 = vpop.permute.xlu0 %126
    %v129 = vadd.f32 %v120, %v127
    %130 = vrot.lane.b32.xlu0 %v115, 64
    %v131 = vpop.permute.xlu0 %130
    %v133 = vadd.f32 %v125, %v131
    %134 = vrot.lane.b32.xlu0 %v24, 32
    %v135 = vpop.permute.xlu0 %134
    %v137 = vadd.f32 %v129, %v135
    %138 = vrot.lane.b32.xlu0 %v115, 32
    %v139 = vpop.permute.xlu0 %138
    %v141 = vadd.f32 %v133, %v139
    %v142 = vmul.f32 %v137, %v137
    %v143 = vsub.f32 %v142, %v141
    %v144 = vmul.f32 %v143, 0.5
    %146 = vrot.lane.b32.xlu0 %v84, 32
    %v147 = vpop.permute.xlu0 %146
    %150 = vrot.lane.b32.xlu0 %v114, 64
    %v151 = vpop.permute.xlu0 %150
    %154 = vrot.lane.b32.xlu0 %v144, 96
    %v155 = vpop.permute.xlu0 %154
    %vm157 = vcmask 261120
    %v158 = vsel %vm157, %v54, %v147
    %vm159 = vcmask 523264
    %v160 = vsel %vm159, %v158, %v151
    %vm161 = vcmask 785408
    %v162 = vsel %vm161, %v160, %v155
    %163 = vst [vmem:[#allocation5] sm:$0xff] %v162
    // Predicated region
    $region10: #{tpu_custom_call.1} parent=1 // pred_check
      _
    $region11: #{tpu_custom_call.1} parent=1 // pred_check_branch
      %165 = sbr.rel (0) target = $region13
    $region12: #{tpu_custom_call.1} parent=1 // pred_region
      %s167 = ssub.s32 128, 128
      %168 = vsyncadd [#allocation4], %s167
      %s170 = sshll.u32 [#allocation5], 4
      %s171 = int_to_ptr.vmem [resolvable:$true] %s170
      %173 = dma.vmem_to_hbm [thread:$0]  %s171, 128, %s1, [#allocation4]
    $region13: #{tpu_custom_call.1} parent=1 // pred_fallthru
      _
    // Predicated region
    $region14: #{tpu_custom_call.1} parent=1 // pred_check
      _
    $region15: #{tpu_custom_call.1} parent=1 // pred_check_branch
      %175 = sbr.rel (0) target = $region17
    $region16: #{tpu_custom_call.1} parent=1 // pred_region
      %176 = dma.done [#allocation4], 128
    $region17: #{tpu_custom_call.1} parent=1 // pred_fallthru
      _
    %177 = vsyncpa [#allocation3], 1
    %178 = vsyncpa [#allocation4], 1

</llo_original>
